<compile_context>
chip_gen: v7x
topology: tpu7x:2x2x1
jax: 0.10.0
libtpu: 0.0.40
codegen_flags: <defaults>
</compile_context>

<pallas_src>
import math

import jax
import jax.numpy as jnp
from jax import lax
from jax.experimental import pallas as pl
from jax.experimental.pallas import tpu as pltpu


# ----------------------------- helpers --------------------------------------

def _round_up(x, m):
    return ((x + m - 1) // m) * m


def _vmem_budget_bytes():
    """~70% of this generation's per-core VMEM (headroom for Mosaic internals).

    v5e/v6e: 128 MiB physical; v7x: 64 MiB per TensorCore (the fallback)."""
    cap = 64 << 20
    try:
        info = pltpu.get_tpu_info()
        cap = int(getattr(info, "vmem_capacity_bytes", cap)) or cap
    except Exception:
        pass
    return (cap * 7) // 10


def _choose_tiles(Np, Kin, Bp, w_bpe, x_bpe, out_bpe, budget):
    """Pick (tn, tk) maximizing the weight tile under the VMEM budget.

    Prefers >= 2 N tiles (megacore / v7x 2-TC 'parallel' axis) and larger tk
    (longer contiguous weight-row DMAs, weights are row-major along K)."""
    usable = int(budget * 0.85)

    tn_cands = [t for t in (1024, 512, 256, 128) if Np % t == 0] or [Np]
    multi = [t for t in tn_cands if Np // t >= 2]
    tn_cands = multi if multi else tn_cands
    tk_cands = [t for t in (2048, 1024, 512, 256, 128) if Kin % t == 0] or [Kin]

    # Resident x (counted x2 to be conservative about buffer allocation).
    x_cost = 2 * Bp * Kin * x_bpe

    best = None
    for tn in tn_cands:
        for tk in tk_cands:
            use = (x_cost
                   + 2 * tn * tk * w_bpe      # double-buffered weight tiles
                   + 2 * tn * 4               # double-buffered bias tile (f32)
                   + 2 * Bp * tn * out_bpe    # double-buffered output block
                   + Bp * tn * 4)             # f32 accumulator scratch
            if use <= usable:
                key = (tn * tk, tk)
                if best is None or key > best[0]:
                    best = (key, tn, tk)
    if best is None:
        return min(tn_cands), min(tk_cands)
    return best[1], best[2]


# ----------------------------- Pallas kernel --------------------------------

# Contract the K (last) axis of both operands — MXU-native transposed RHS.
_DN = (((1,), (1,)), ((), ()))


def _linear_bias_kernel(x_ref, w_ref, b_ref, o_ref, acc_ref):
    """Tiled y = x @ W^T + b with a grid-resident x and f32 accumulator.

    Grid = (N tiles [parallel], K tiles [arbitrary/reduction]).
    x_ref : (Bp, Kin)  resident, sliced per-k below
    w_ref : (tn, tk)   streamed weight tile
    b_ref : (1, tn)    bias tile for this N block (re-DMA'd only when j changes)
    """
    k = pl.program_id(1)

    @pl.when(k == 0)
    def _():
        acc_ref[...] = jnp.zeros_like(acc_ref)

    tk = w_ref.shape[1]
    ks = pl.multiple_of(k * tk, 128)          # lane-aligned dynamic start
    x_blk = x_ref[:, pl.ds(ks, tk)]           # (Bp, tk)

    acc_ref[...] += lax.dot_general(
        x_blk, w_ref[...], dimension_numbers=_DN,
        preferred_element_type=jnp.float32)

    @pl.when(k == pl.num_programs(1) - 1)
    def _():
        o_ref[...] = (acc_ref[...] + b_ref[...]).astype(o_ref.dtype)


# ------------------------------ Prepare + forward ----------------------------

def prepare_noisy_linear(params, *, compute_dtype=jnp.float32):
    """One-time prepack (per sample_noise()/parameter update), NOT per forward.

    Pads to lane-dense shapes, folds eps_out into weight_sigma, concatenates
    [W_mu | W_sigma*eps_out] along K, folds the effective bias, and casts to
    the streaming dtype (bf16 recommended in production: kernel is HBM-bound
    on weight bytes)."""
    N, K = params["weight_mu"].shape
    Kp = _round_up(K, 128)
    Np = _round_up(N, 128)

    def pad2(a):
        return jnp.pad(a, ((0, Np - a.shape[0]), (0, Kp - a.shape[1])))

    wmu = pad2(params["weight_mu"])
    wsig_eff = pad2(params["weight_sigma"] * params["epsilon_out"][:, None])
    w_cat = jnp.concatenate([wmu, wsig_eff], axis=1).astype(compute_dtype)

    eps_in_row = jnp.pad(params["epsilon_in"], (0, Kp - K)) \
        .astype(compute_dtype).reshape(1, Kp)

    # bias_epsilon == epsilon_out in the PyTorch module.
    b_train = jnp.pad(params["bias_mu"] + params["bias_sigma"] * params["epsilon_out"],
                      (0, Np - N)).astype(jnp.float32).reshape(1, Np)
    b_eval = jnp.pad(params["bias_mu"], (0, Np - N)) \
        .astype(jnp.float32).reshape(1, Np)

    return dict(w_cat=w_cat, eps_in_row=eps_in_row,
                b_train=b_train, b_eval=b_eval,
                N=N, K=K, Np=Np, Kp=Kp, compute_dtype=compute_dtype)


def noisy_linear_forward(x, prepared, training=True):
    """Forward pass matching NoisyLinear.forward (train: noisy W/b; eval: mu)."""
    B, K = x.shape
    assert K == prepared["K"], "in_features mismatch"
    N, Np, Kp = prepared["N"], prepared["Np"], prepared["Kp"]
    cdt = prepared["compute_dtype"]
    out_dtype = x.dtype

    # Sublane-aligned batch: 8 rows for 4-byte, 16 for bf16 (packed sublanes).
    sub = max(8, 32 // jnp.dtype(cdt).itemsize)
    Bp = _round_up(max(B, sub), sub)

    xp = jnp.pad(x, ((0, Bp - B), (0, Kp - K))).astype(cdt)
    if training:
        # [x | x * eps_in] matches the prepacked [W_mu | W_sigma*eps_out].
        x_in = jnp.concatenate([xp, xp * prepared["eps_in_row"]], axis=1)
        bias = prepared["b_train"]
    else:
        x_in = xp                 # only the W_mu half of w_cat is streamed
        bias = prepared["b_eval"]
    Kin = x_in.shape[1]
    w = prepared["w_cat"]         # (Np, 2*Kp)

    budget = _vmem_budget_bytes()
    tn, tk = _choose_tiles(Np, Kin, Bp,
                           w_bpe=jnp.dtype(cdt).itemsize,
                           x_bpe=jnp.dtype(cdt).itemsize,
                           out_bpe=jnp.dtype(out_dtype).itemsize,
                           budget=budget)
    grid = (Np // tn, Kin // tk)

    y = pl.pallas_call(
        _linear_bias_kernel,
        out_shape=jax.ShapeDtypeStruct((Bp, Np), out_dtype),
        grid=grid,
        in_specs=[
            pl.BlockSpec((Bp, Kin), lambda j, k: (0, 0)),   # x: grid-resident
            pl.BlockSpec((tn, tk), lambda j, k: (j, k)),    # weight tiles
            pl.BlockSpec((1, tn), lambda j, k: (0, j)),     # bias per N tile
        ],
        out_specs=pl.BlockSpec((Bp, tn), lambda j, k: (0, j)),
        scratch_shapes=[pltpu.VMEM((Bp, tn), jnp.float32)],
        compiler_params=pltpu.CompilerParams(
            dimension_semantics=("parallel", "arbitrary"),  # N parallel, K reduce
            vmem_limit_bytes=budget),
    )(x_in, w, bias)

    return y[:B, :N]


# -------------------------- Parameter / noise init ---------------------------

def _scale_noise(key, size):
    # f(x) = sign(x) * sqrt(|x|) applied to standard normal samples.
    x = jax.random.normal(key, (size,), dtype=jnp.float32)
    return jnp.sign(x) * jnp.sqrt(jnp.abs(x))


def init_noisy_linear(key, in_features, out_features, std_init=0.5):
    k_wmu, k_bmu, k_ein, k_eout = jax.random.split(key, 4)
    mu_range = 1.0 / math.sqrt(in_features)

    weight_mu = jax.random.uniform(
        k_wmu, (out_features, in_features), jnp.float32,
        minval=-mu_range, maxval=mu_range)
    weight_sigma = jnp.full((out_features, in_features),
                            std_init / math.sqrt(in_features), jnp.float32)
    bias_mu = jax.random.uniform(
        k_bmu, (out_features,), jnp.float32, minval=-mu_range, maxval=mu_range)
    bias_sigma = jnp.full((out_features,),
                          std_init / math.sqrt(out_features), jnp.float32)

    # sample_noise(): factored Gaussian noise. Only the factors are stored.
    epsilon_in = _scale_noise(k_ein, in_features)
    epsilon_out = _scale_noise(k_eout, out_features)

    return dict(weight_mu=weight_mu, weight_sigma=weight_sigma,
                bias_mu=bias_mu, bias_sigma=bias_sigma,
                epsilon_in=epsilon_in, epsilon_out=epsilon_out)


# --------------------------------- Main --------------------------------------

def _check(key, batch, in_features, out_features, compute_dtype, atol, rtol):
    k_params, k_x = jax.random.split(key)
    params = init_noisy_linear(k_params, in_features, out_features, std_init=0.5)
    x = jax.random.normal(k_x, (batch, in_features), dtype=jnp.float32)

    prepared = prepare_noisy_linear(params, compute_dtype=compute_dtype)

    y_train = jax.block_until_ready(noisy_linear_forward(x, prepared, training=True))
    y_eval = jax.block_until_ready(noisy_linear_forward(x, prepared, training=False))

    # Pure-JAX reference (dense epsilon formed only here, for checking).
    w_eps = jnp.outer(params["epsilon_out"], params["epsilon_in"])
    w_eff = params["weight_mu"] + params["weight_sigma"] * w_eps
    b_eff = params["bias_mu"] + params["bias_sigma"] * params["epsilon_out"]
    ref_train = x @ w_eff.T + b_eff
    ref_eval = x @ params["weight_mu"].T + params["bias_mu"]

    assert y_train.shape == (batch, out_features)
    assert y_eval.shape == (batch, out_features)
    assert jnp.allclose(y_train, ref_train, atol=atol, rtol=rtol), \
        f"train mismatch ({in_features}x{out_features}, {compute_dtype})"
    assert jnp.allclose(y_eval, ref_eval, atol=atol, rtol=rtol), \
        f"eval mismatch ({in_features}x{out_features}, {compute_dtype})"


if __name__ == "__main__":
    key = jax.random.PRNGKey(0)

    # 1) Small shapes (single-tile grid), f32 streaming — strict tolerance.
    _check(jax.random.fold_in(key, 0), batch=8, in_features=32, out_features=64,
           compute_dtype=jnp.float32, atol=1e-4, rtol=1e-4)

    # 2) Tiled path: multiple K (reduction/accumulator) and N (parallel) tiles.
    _check(jax.random.fold_in(key, 1), batch=16, in_features=2048, out_features=512,
           compute_dtype=jnp.float32, atol=1e-3, rtol=1e-3)

    # 3) bf16 weight/activation streaming (production default: kernel is
    #    HBM-bound on weight bytes), f32 accumulation — relaxed tolerance.
    _check(jax.random.fold_in(key, 2), batch=16, in_features=2048, out_features=512,
           compute_dtype=jnp.bfloat16, atol=5e-2, rtol=5e-2)

    print("KERNEL_OK")
</pallas_src>

<mosaic_0001>
module attributes {stable_mosaic.version = 11 : i64} {
  func.func @_linear_bias_kernel(%arg0: i32, %arg1: i32, %arg2: memref<8x256xf32, #tpu.memory_space<vmem>>, %arg3: memref<128x256xf32, #tpu.memory_space<vmem>>, %arg4: memref<1x128xf32, #tpu.memory_space<vmem>>, %arg5: memref<8x128xf32, #tpu.memory_space<vmem>>, %arg6: memref<8x128xf32, #tpu.memory_space<vmem>>) attributes {dimension_semantics = [#tpu.dimension_semantics<parallel>, #tpu.dimension_semantics<arbitrary>], iteration_bounds = array<i64: 1, 1>, scalar_prefetch = 0 : i64, scratch_operands = 1 : i64, tpu.core_type = #tpu.core_type<tc>, window_params = [{pipeline_mode = #tpu.pipeline_mode<synchronous>, transform_indices = @transform_0, window_bounds = array<i64: 8, 256>}, {transform_indices = @transform_1, window_bounds = array<i64: 128, 256>}, {transform_indices = @transform_2, window_bounds = array<i64: 1, 128>}, {transform_indices = @transform_3, window_bounds = array<i64: 8, 128>}]} {
    %c0_i32 = arith.constant 0 : i32
    %0 = arith.cmpi eq, %arg1, %c0_i32 : i32
    %1 = arith.extui %0 : i1 to i32
    %c0_i32_0 = arith.constant 0 : i32
    %2 = arith.cmpi ne, %1, %c0_i32_0 : i32
    scf.if %2 {
      %cst_9 = arith.constant 0.000000e+00 : f32
      %15 = vector.broadcast %cst_9 : f32 to vector<8x128xf32>
      %c0_10 = arith.constant 0 : index
      %c0_11 = arith.constant 0 : index
      %16 = vector.load %arg6[%c0_10, %c0_11] : memref<8x128xf32, #tpu.memory_space<vmem>>, vector<8x128xf32>
      tpu.vector_store %arg6[%c0_10, %c0_11], %15 {strides = array<i32>} : memref<8x128xf32, #tpu.memory_space<vmem>>, vector<8x128xf32>,
    } else {
    }
    %c256_i32 = arith.constant 256 : i32
    %3 = arith.muli %arg1, %c256_i32 : i32
    %4 = tpu.assume_multiple %3, 128 : i32
    %c0 = arith.constant 0 : index
    %5 = arith.index_cast %4 : i32 to index
    %6 = vector.load %arg2[%c0, %5] : memref<8x256xf32, #tpu.memory_space<vmem>>, vector<8x256xf32>
    %c0_1 = arith.constant 0 : index
    %c0_2 = arith.constant 0 : index
    %7 = vector.load %arg6[%c0_1, %c0_2] : memref<8x128xf32, #tpu.memory_space<vmem>>, vector<8x128xf32>
    %c0_3 = arith.constant 0 : index
    %c0_4 = arith.constant 0 : index
    %8 = vector.load %arg3[%c0_3, %c0_4] : memref<128x256xf32, #tpu.memory_space<vmem>>, vector<128x256xf32>
    %cst = arith.constant dense<0.000000e+00> : vector<8x128xf32>
    %9 = tpu.matmul %6, %8, %cst {dimension_numbers = #tpu.dot_dimension_numbers<[1], [1], [0], [0], [0, 0, 1, 0], [], []>} : vector<8x256xf32>, vector<128x256xf32>, vector<8x128xf32> -> vector<8x128xf32>
    %10 = arith.addf %7, %9 : vector<8x128xf32>
    %c0_5 = arith.constant 0 : index
    %c0_6 = arith.constant 0 : index
    %11 = vector.load %arg6[%c0_5, %c0_6] : memref<8x128xf32, #tpu.memory_space<vmem>>, vector<8x128xf32>
    tpu.vector_store %arg6[%c0_5, %c0_6], %10 {strides = array<i32>} : memref<8x128xf32, #tpu.memory_space<vmem>>, vector<8x128xf32>,
    %c0_i32_7 = arith.constant 0 : i32
    %12 = arith.cmpi eq, %arg1, %c0_i32_7 : i32
    %13 = arith.extui %12 : i1 to i32
    %c0_i32_8 = arith.constant 0 : i32
    %14 = arith.cmpi ne, %13, %c0_i32_8 : i32
    scf.if %14 {
      %c0_9 = arith.constant 0 : index
      %c0_10 = arith.constant 0 : index
      %15 = vector.load %arg6[%c0_9, %c0_10] : memref<8x128xf32, #tpu.memory_space<vmem>>, vector<8x128xf32>
      %c0_11 = arith.constant 0 : index
      %c0_12 = arith.constant 0 : index
      %16 = vector.load %arg4[%c0_11, %c0_12] : memref<1x128xf32, #tpu.memory_space<vmem>>, vector<1x128xf32>
      %17 = vector.broadcast %16 : vector<1x128xf32> to vector<8x128xf32>
      %18 = arith.addf %15, %17 : vector<8x128xf32>
      %c0_13 = arith.constant 0 : index
      %c0_14 = arith.constant 0 : index
      %19 = vector.load %arg5[%c0_13, %c0_14] : memref<8x128xf32, #tpu.memory_space<vmem>>, vector<8x128xf32>
      tpu.vector_store %arg5[%c0_13, %c0_14], %18 {strides = array<i32>} : memref<8x128xf32, #tpu.memory_space<vmem>>, vector<8x128xf32>,
    } else {
    }
    return
  }
  func.func @transform_0(%arg0: i32, %arg1: i32) -> (i32, i32) {
    %c0_i32 = arith.constant 0 : i32
    %c0_i32_0 = arith.constant 0 : i32
    %c0_i32_1 = arith.constant 0 : i32
    return %c0_i32, %c0_i32_0 : i32, i32
  }
  func.func @transform_1(%arg0: i32, %arg1: i32) -> (i32, i32) {
    %c0_i32 = arith.constant 0 : i32
    return %arg0, %arg1 : i32, i32
  }
  func.func @transform_2(%arg0: i32, %arg1: i32) -> (i32, i32) {
    %c0_i32 = arith.constant 0 : i32
    %c0_i32_0 = arith.constant 0 : i32
    return %c0_i32, %arg0 : i32, i32
  }
  func.func @transform_3(%arg0: i32, %arg1: i32) -> (i32, i32) {
    %c0_i32 = arith.constant 0 : i32
    %c0_i32_0 = arith.constant 0 : i32
    return %c0_i32, %arg0 : i32, i32
  }
}

</mosaic_0001>

<llo_original>
// kernel: tpu_custom_call.1
$region0: #{tpu_custom_call.1}
  #allocation0 [shape = 'u32[]', space=smem, size = 0x4, offset = 0x4, fixed_abs, tag = 'smem constant byte address 0x4 - core index']
  #allocation1 [shape = 'u32[144,128]{1,0:T(1,128)}', space=vmem, size = 0x12000, scoped, tag = 'internal scratch']
  #allocation2 [shape = 'f32[8,128]{1,0:T(8,128)}', space=vmem, size = 0x1000, scoped, tag = 'scratch operand']
  %s0 = inlined_call_operand.hbm [shape: f32[8,256], index: 0, kind: input, shape index: {}]
  %s1 = inlined_call_operand.hbm [shape: f32[128,256], index: 1, kind: input, shape index: {}]
  %s2 = inlined_call_operand.vmem [shape: f32[1,128], index: 2, kind: input, shape index: {}]
  %s3 = inlined_call_operand.hbm [shape: f32[8,128], index: 3, kind: output, shape index: {}]
  %s4 = sld [smem:[#allocation0]]
  $region38: #{tpu_custom_call.1} parent=0
    _
  %s6 = ssub.s32 1, %s4
  %s7 = scalar_select 0, %s6, %s4
  $region1: #{tpu_custom_call.1} parent=0
    #allocation3 [shape = 'u8[8192]{0}', space=vmem, size = 0x2000, scoped, tag = 'input window, operand 0, single buffered']
    #allocation4 [shape = 's32[1]{0}', space=sflag, size = 0x4, scoped, tag = 'scoped memory for tpu_custom_call.1']
    #allocation5 [shape = 's32[1]{0}', space=sflag, size = 0x4, scoped, tag = 'scoped memory for tpu_custom_call.1']
    #allocation6 [shape = 'u8[131072]{0}', space=vmem, size = 0x20000, scoped, tag = 'input window, operand 1, single buffered']
    #allocation7 [shape = 's32[1]{0}', space=sflag, size = 0x4, scoped, tag = 'scoped memory for tpu_custom_call.1']
    #allocation8 [shape = 'u8[4096]{0}', space=vmem, size = 0x1000, scoped, tag = 'output window, operand 0, single buffered']
    %8 = vsyncpa [#allocation4], 0
    %9 = vsyncpa [#allocation7], 0
    %10 = vsyncpa [#allocation5], 0
    // Predicated region
    $region2: #{tpu_custom_call.1} parent=1 // pred_check
      _
    $region3: #{tpu_custom_call.1} parent=1 // pred_check_branch
      %12 = sbr.rel (0) target = $region5
    $region4: #{tpu_custom_call.1} parent=1 // pred_region
      %s14 = ssub.s32 256, 256
      %15 = vsyncadd [#allocation4], %s14
      %s17 = sshll.u32 [#allocation3], 4
      %s18 = int_to_ptr.vmem [resolvable:$true] %s17
      %20 = dma.hbm_to_vmem [thread:$0]  %s0, 256, %s18, [#allocation4]
    $region5: #{tpu_custom_call.1} parent=1 // pred_fallthru
      _
    // Predicated region
    $region6: #{tpu_custom_call.1} parent=1 // pred_check
      _
    $region7: #{tpu_custom_call.1} parent=1 // pred_check_branch
      %22 = sbr.rel (0) target = $region9
    $region8: #{tpu_custom_call.1} parent=1 // pred_region
      %s24 = ssub.s32 4096, 4096
      %25 = vsyncadd [#allocation7], %s24
      %s26 = sshll.u32 [#allocation6], 4
      %s27 = int_to_ptr.vmem [resolvable:$true] %s26
      %32 = dma.hbm_to_vmem [thread:$0]  %s1, 4096, %s27, [#allocation7], 256, 256, 16
    $region9: #{tpu_custom_call.1} parent=1 // pred_fallthru
      _
    // Predicated region
    $region10: #{tpu_custom_call.1} parent=1 // pred_check
      _
    $region11: #{tpu_custom_call.1} parent=1 // pred_check_branch
      %34 = sbr.rel (0) target = $region13
    $region12: #{tpu_custom_call.1} parent=1 // pred_region
      _
    $region13: #{tpu_custom_call.1} parent=1 // pred_fallthru
      _
    // Predicated region
    $region14: #{tpu_custom_call.1} parent=1 // pred_check
      _
    $region15: #{tpu_custom_call.1} parent=1 // pred_check_branch
      %36 = sbr.rel (0) target = $region17
    $region16: #{tpu_custom_call.1} parent=1 // pred_region
      %37 = dma.done [#allocation4], 256
    $region17: #{tpu_custom_call.1} parent=1 // pred_fallthru
      _
    // Predicated region
    $region18: #{tpu_custom_call.1} parent=1 // pred_check
      _
    $region19: #{tpu_custom_call.1} parent=1 // pred_check_branch
      %39 = sbr.rel (0) target = $region21
    $region20: #{tpu_custom_call.1} parent=1 // pred_region
      %40 = dma.done [#allocation7], 4096
    $region21: #{tpu_custom_call.1} parent=1 // pred_fallthru
      _
    %p41 = scmp.eq.s32.totalorder 0, 0
    // Predicated region
    $region22: #{tpu_custom_call.1} parent=1 // pred_check
      %p42 = pneg %p41
    $region23: #{tpu_custom_call.1} parent=1 // pred_check_branch
      %44 = sbr.rel (%p42) target = $region25
    $region24: #{tpu_custom_call.1} parent=1 // pred_region
      %45 = vst [vmem:[#allocation2] sm:$0xff] 0.0
    $region25: #{tpu_custom_call.1} parent=1 // pred_fallthru
      _
    %s46 = smul.u32 0, 256
    %s47 = sshra.s32 %s46, 7
    %s48 = sand.u32 %s46, 127
    %s49 = smul.addr %s47, 8
    %s50 = scalar_lea.vmem [#allocation3], %s49
    %v51 = vld [vmem:[%s50] sm:$0xff]
    %v52 = vld [vmem:[%s50 + $0x8] sm:$0xff]
    %v53 = vld [vmem:[#allocation2] sm:$0xff]
    %v54 = vld [vmem:[#allocation6] sm:$0xff]
    %v55 = vld [vmem:[#allocation6 + $0x8] sm:$0xff]
    %v56 = vld [vmem:[#allocation6 + $0x10] sm:$0xff]
    %v57 = vld [vmem:[#allocation6 + $0x18] sm:$0xff]
    %v58 = vld [vmem:[#allocation6 + $0x20] sm:$0xff]
    %v59 = vld [vmem:[#allocation6 + $0x28] sm:$0xff]
    %v60 = vld [vmem:[#allocation6 + $0x30] sm:$0xff]
    %v61 = vld [vmem:[#allocation6 + $0x38] sm:$0xff]
    %v62 = vld [vmem:[#allocation6 + $0x40] sm:$0xff]
    %v63 = vld [vmem:[#allocation6 + $0x48] sm:$0xff]
    %v64 = vld [vmem:[#allocation6 + $0x50] sm:$0xff]
    %v65 = vld [vmem:[#allocation6 + $0x58] sm:$0xff]
    %v66 = vld [vmem:[#allocation6 + $0x60] sm:$0xff]
    %v67 = vld [vmem:[#allocation6 + $0x68] sm:$0xff]
    %v68 = vld [vmem:[#allocation6 + $0x70] sm:$0xff]
    %v69 = vld [vmem:[#allocation6 + $0x78] sm:$0xff]
    %v70 = vld [vmem:[#allocation6 + $0x80] sm:$0xff]
    %v71 = vld [vmem:[#allocation6 + $0x88] sm:$0xff]
    %v72 = vld [vmem:[#allocation6 + $0x90] sm:$0xff]
    %v73 = vld [vmem:[#allocation6 + $0x98] sm:$0xff]
    %v74 = vld [vmem:[#allocation6 + $0xa0] sm:$0xff]
    %v75 = vld [vmem:[#allocation6 + $0xa8] sm:$0xff]
    %v76 = vld [vmem:[#allocation6 + $0xb0] sm:$0xff]
    %v77 = vld [vmem:[#allocation6 + $0xb8] sm:$0xff]
    %v78 = vld [vmem:[#allocation6 + $0xc0] sm:$0xff]
    %v79 = vld [vmem:[#allocation6 + $0xc8] sm:$0xff]
    %v80 = vld [vmem:[#allocation6 + $0xd0] sm:$0xff]
    %v81 = vld [vmem:[#allocation6 + $0xd8] sm:$0xff]
    %v82 = vld [vmem:[#allocation6 + $0xe0] sm:$0xff]
    %v83 = vld [vmem:[#allocation6 + $0xe8] sm:$0xff]
    %v84 = vld [vmem:[#allocation6 + $0xf0] sm:$0xff]
    %v85 = vld [vmem:[#allocation6 + $0xf8] sm:$0xff]
    %86 = vmatprep.subr.mxu0 %v55
    %87 = vmatpush1.xpose.msra.mxu0 %v54
    %88 = vmatprep.subr.mxu0 %v57
    %89 = vmatpush1.xpose.msra.mxu0 %v56
    %90 = vmatprep.subr.mxu0 %v59
    %91 = vmatpush1.xpose.msra.mxu0 %v58
    %92 = vmatprep.subr.mxu0 %v61
    %93 = vmatpush1.xpose.msra.mxu0 %v60
    %94 = vmatprep.subr.mxu0 %v63
    %95 = vmatpush1.xpose.msra.mxu0 %v62
    %96 = vmatprep.subr.mxu0 %v65
    %97 = vmatpush1.xpose.msra.mxu0 %v64
    %98 = vmatprep.subr.mxu0 %v67
    %99 = vmatpush1.xpose.msra.mxu0 %v66
    %100 = vmatprep.subr.mxu0 %v69
    %101 = vmatpush1.xpose.msra.mxu0 %v68
    %102 = vmatprep.subr.mxu0 %v71
    %103 = vmatpush1.xpose.msra.mxu0 %v70
    %104 = vmatprep.subr.mxu0 %v73
    %105 = vmatpush1.xpose.msra.mxu0 %v72
    %106 = vmatprep.subr.mxu0 %v75
    %107 = vmatpush1.xpose.msra.mxu0 %v74
    %108 = vmatprep.subr.mxu0 %v77
    %109 = vmatpush1.xpose.msra.mxu0 %v76
    %110 = vmatprep.subr.mxu0 %v79
    %111 = vmatpush1.xpose.msra.mxu0 %v78
    %112 = vmatprep.subr.mxu0 %v81
    %113 = vmatpush1.xpose.msra.mxu0 %v80
    %114 = vmatprep.subr.mxu0 %v83
    %115 = vmatpush1.xpose.msra.mxu0 %v82
    %116 = vmatprep.subr.mxu0 %v85
    %117 = vmatpush1.xpose.msra.mxu0 %v84
    %118 = vmatprep.subr.mxu0 0.0
    %119 = vmatpush1.xpose.msra.mxu0 0.0
    %120 = vmatprep.subr.mxu0 0.0
    %121 = vmatpush1.xpose.msra.mxu0 0.0
    %122 = vmatprep.subr.mxu0 0.0
    %123 = vmatpush1.xpose.msra.mxu0 0.0
    %124 = vmatprep.subr.mxu0 0.0
    %125 = vmatpush1.xpose.msra.mxu0 0.0
    %126 = vmatprep.subr.mxu0 0.0
    %127 = vmatpush1.xpose.msra.mxu0 0.0
    %128 = vmatprep.subr.mxu0 0.0
    %129 = vmatpush1.xpose.msra.mxu0 0.0
    %130 = vmatprep.subr.mxu0 0.0
    %131 = vmatpush1.xpose.msra.mxu0 0.0
    %132 = vmatprep.subr.mxu0 0.0
    %133 = vmatpush1.xpose.msra.mxu0 0.0
    %134 = vmatprep.subr.mxu0 0.0
    %135 = vmatpush1.xpose.msra.mxu0 0.0
    %136 = vmatprep.subr.mxu0 0.0
    %137 = vmatpush1.xpose.msra.mxu0 0.0
    %138 = vmatprep.subr.mxu0 0.0
    %139 = vmatpush1.xpose.msra.mxu0 0.0
    %140 = vmatprep.subr.mxu0 0.0
    %141 = vmatpush1.xpose.msra.mxu0 0.0
    %142 = vmatprep.subr.mxu0 0.0
    %143 = vmatpush1.xpose.msra.mxu0 0.0
    %144 = vmatprep.subr.mxu0 0.0
    %145 = vmatpush1.xpose.msra.mxu0 0.0
    %146 = vmatprep.subr.mxu0 0.0
    %147 = vmatpush1.xpose.msra.mxu0 0.0
    %148 = vmatprep.subr.mxu0 0.0
    %149 = vmatpush1.xpose.msra.mxu0 0.0
    %150 = vmatprep.mubr.f32.mxu0 %v52
    %151 = vmatmul.mubr.f32.gmra.mrb[0].mxu0 %v51
    %v152 = vpop.f32.mrb[0].mxu0
    %v153 = vadd.f32 0.0, %v152
    %v154 = vpop.f32.mrb[0].mxu0
    %155 = vdwg.mxu0
    %v156 = vadd.f32 %v53, %v153
    %157 = vst [vmem:[#allocation2] sm:$0xff] %v156
    // Predicated region
    $region26: #{tpu_custom_call.1} parent=1 // pred_check
      %p158 = pneg %p41
    $region27: #{tpu_custom_call.1} parent=1 // pred_check_branch
      %160 = sbr.rel (%p158) target = $region29
    $region28: #{tpu_custom_call.1} parent=1 // pred_region
      %v161 = vld [vmem:[#allocation2] sm:$0xff]
      %v162 = vld [vmem:[%s2] sm:$0x1]
      %v164 = vlaneseq
      %v165 = vshrl.u32 %v164, 7
      %v166 = vsub.s32 0, %v165
      %v167 = vrot.slane %v162, %v166
      %v169 = vadd.f32 %v161, %v167
      %170 = vst [vmem:[#allocation8] sm:$0xff] %v169
    $region29: #{tpu_custom_call.1} parent=1 // pred_fallthru
      _
    // Predicated region
    $region30: #{tpu_custom_call.1} parent=1 // pred_check
      _
    $region31: #{tpu_custom_call.1} parent=1 // pred_check_branch
      %172 = sbr.rel (0) target = $region33
    $region32: #{tpu_custom_call.1} parent=1 // pred_region
      %s174 = ssub.s32 128, 128
      %175 = vsyncadd [#allocation5], %s174
      %s177 = sshll.u32 [#allocation8], 4
      %s178 = int_to_ptr.vmem [resolvable:$true] %s177
      %180 = dma.vmem_to_hbm [thread:$0]  %s178, 128, %s3, [#allocation5]
    $region33: #{tpu_custom_call.1} parent=1 // pred_fallthru
      _
    // Predicated region
    $region34: #{tpu_custom_call.1} parent=1 // pred_check
      _
    $region35: #{tpu_custom_call.1} parent=1 // pred_check_branch
      %182 = sbr.rel (0) target = $region37
    $region36: #{tpu_custom_call.1} parent=1 // pred_region
      %183 = dma.done [#allocation5], 128
    $region37: #{tpu_custom_call.1} parent=1 // pred_fallthru
      _
    %184 = vsyncpa [#allocation4], 1
    %185 = vsyncpa [#allocation7], 1
    %186 = vsyncpa [#allocation5], 1

</llo_original>
